<compile_context>
chip_gen: v6e
topology: v6e:2x2x1
jax: 0.10.0
libtpu: 0.0.40
codegen_flags: <defaults>
</compile_context>

<pallas_src>
from functools import partial

import jax
import jax.numpy as jnp
from jax import lax
from jax.experimental import pallas as pl
from jax.experimental.pallas import tpu as pltpu

PAIRNORM_EPS = 1e-5
PAIRNORM_SCALE = 1.0


def _decoder_kernel(x_ref, w1_ref, w2_ref, b2_ref, o_ref):
    x = x_ref[...]          # [N, H]       f32
    w1 = w1_ref[...]        # [H, 4H]      bf16 (pre-cast once in prepare step)
    w2 = w2_ref[...]        # [4H, O_pad]  bf16 (zero-padded, pre-cast)
    b2 = b2_ref[...]        # [1, O_pad]   f32  (zero-padded)

    n = x.shape[0]

    # ---- PairNorm centering folded into x ----
    #   mean(x @ W1 + b1, axis=0) == mean(x, 0) @ W1 + b1
    # so (x @ W1 + b1) - mean(.) == (x - mean(x, 0)) @ W1 ; b1 cancels EXACTLY
    # (only valid for column-mean centering with a uniform scale — if the norm
    # ever changes, b1 must be reinstated).
    xc = x - jnp.mean(x, axis=0, keepdims=True)               # [N, H] f32

    # ---- Linear(H -> 4H) on the MXU (bf16 operands, f32 accumulate) ----
    # h is already the PairNorm-centered pre-activation.
    h = jnp.dot(xc.astype(jnp.bfloat16), w1,
                preferred_element_type=jnp.float32)           # [N, 4H] f32

    # ---- ReLU first (VPU); PairNorm scale deferred past the second matmul --
    # s = scale * rsqrt(eps + mean_row_sqnorm) > 0, hence
    #   relu(s*h) @ W2 + b2 == s * (relu(h) @ W2) + b2.
    # The XLU reduction + EUP rsqrt can now overlap the second MXU matmul.
    r = jnp.maximum(h, 0.0)                                   # [N, 4H] f32
    msq = jnp.sum(h * h) * (1.0 / n)                          # mean row sq-norm
    s = PAIRNORM_SCALE * lax.rsqrt(PAIRNORM_EPS + msq)        # scalar, f32

    # ---- Linear(4H -> O_pad); scale applied on the output tile, then bias --
    out = jnp.dot(r.astype(jnp.bfloat16), w2,
                  preferred_element_type=jnp.float32)         # [N, O_pad] f32
    o_ref[...] = s * out + b2                                 # lane-dense store


def prepare_decoder_params(params):
    """One-time prep: cast weights to bf16 and zero-pad the output projection
    to a lane-dense multiple of 128 columns.

    NOTE: b1 is dropped on purpose — PairNorm's column-mean subtraction
    cancels it exactly. If the norm changes (scale_individually, no
    centering), b1 must be reinstated.
    NOTE: if params are updated in place (training), the padded columns of
    w2p/b2p must stay exactly zero or the [:, :O] slice picks up garbage.
    """
    w1 = params["w1"]                          # [H, 4H]
    w2 = params["w2"]                          # [4H, O]
    b2 = params["b2"]                          # [1, O]
    h4, o = w2.shape
    o_pad = max(128, ((o + 127) // 128) * 128)

    w2p = jnp.zeros((h4, o_pad), jnp.bfloat16).at[:, :o].set(w2.astype(jnp.bfloat16))
    b2p = jnp.zeros((1, o_pad), jnp.float32).at[:, :o].set(b2.astype(jnp.float32))
    return {
        "w1": w1.astype(jnp.bfloat16),
        "w2p": w2p,
        "b2p": b2p,
        "out_channels": int(o),
    }


def _full_vmem():
    # Full-array block resident in VMEM (no grid, no index_map needed).
    return pl.BlockSpec(memory_space=pltpu.MemorySpace.VMEM)


@partial(jax.jit, static_argnames=("out_channels",))
def _decoder_forward_impl(x, w1, w2p, b2p, out_channels):
    n = x.shape[0]
    o_pad = w2p.shape[1]
    out = pl.pallas_call(
        _decoder_kernel,
        out_shape=jax.ShapeDtypeStruct((n, o_pad), jnp.float32),
        in_specs=[_full_vmem(), _full_vmem(), _full_vmem(), _full_vmem()],
        out_specs=_full_vmem(),
    )(x, w1, w2p, b2p)
    # Slice back from the lane-dense padded slab; consumers that can read
    # [:, :O] directly should take the padded output instead (saves one copy).
    return out[:, :out_channels]


def decoder_forward(x, prepared_params):
    """x: [N, H] float32.  prepared_params: output of prepare_decoder_params.

    Single-block kernel (no grid): at these small shapes the op is launch /
    DMA-latency bound, so everything fits one VMEM-resident block.
    """
    return _decoder_forward_impl(
        x,
        prepared_params["w1"],
        prepared_params["w2p"],
        prepared_params["b2p"],
        prepared_params["out_channels"],
    )


def init_decoder_params(key, hidden_channels, out_channels):
    h, h4, o = hidden_channels, 4 * hidden_channels, out_channels
    k1, k2, k3, k4 = jax.random.split(key, 4)
    # Deterministic, Kaiming-ish scaled init; weights stored as [in, out].
    w1 = jax.random.normal(k1, (h, h4), jnp.float32) * (1.0 / jnp.sqrt(h))
    b1 = jax.random.normal(k2, (1, h4), jnp.float32) * 0.01   # cancelled by PairNorm
    w2 = jax.random.normal(k3, (h4, o), jnp.float32) * (1.0 / jnp.sqrt(h4))
    b2 = jax.random.normal(k4, (1, o), jnp.float32) * 0.01
    return {"w1": w1, "b1": b1, "w2": w2, "b2": b2}


def decoder_reference(x, params):
    """Plain-JAX f32 reference mirroring the PyTorch module (b1 included)."""
    h = x @ params["w1"] + params["b1"]
    h = h - jnp.mean(h, axis=0, keepdims=True)
    h = PAIRNORM_SCALE * h / jnp.sqrt(PAIRNORM_EPS + jnp.mean(jnp.sum(h * h, axis=-1)))
    h = jnp.maximum(h, 0.0)
    return h @ params["w2"] + params["b2"]


if __name__ == "__main__":
    key = jax.random.PRNGKey(0)
    kx, kp = jax.random.split(key)

    N = 64                 # number of graph nodes
    HIDDEN = 32            # hidden_channels
    OUT = 16               # out_channels

    x = jax.random.normal(kx, (N, HIDDEN), jnp.float32)
    # edge_index is unused by the decoder's MLP; kept for interface parity.
    edge_index = jnp.zeros((2, 8), jnp.int32)

    params = init_decoder_params(kp, HIDDEN, OUT)
    prepared = prepare_decoder_params(params)   # one-time weight prep (hoisted)

    out = decoder_forward(x, prepared)
    out = jax.block_until_ready(out)

    ref = decoder_reference(x, params)
    assert out.shape == (N, OUT)
    # bf16 MXU operands (f32 accumulate) -> tolerance sized for bf16 rounding.
    assert jnp.allclose(out, ref, atol=1e-2, rtol=1e-2), "mismatch vs reference"

    print("KERNEL_OK")
</pallas_src>

<mosaic_0001>
module attributes {stable_mosaic.version = 11 : i64} {
  func.func @_decoder_kernel(%arg0: memref<64x32xf32, #tpu.memory_space<vmem>>, %arg1: memref<32x128xbf16, #tpu.memory_space<vmem>>, %arg2: memref<128x128xbf16, #tpu.memory_space<vmem>>, %arg3: memref<1x128xf32, #tpu.memory_space<vmem>>, %arg4: memref<64x128xf32, #tpu.memory_space<vmem>>) attributes {dimension_semantics = [], scalar_prefetch = 0 : i64, scratch_operands = 0 : i64, tpu.core_type = #tpu.core_type<tc>} {
    %c0 = arith.constant 0 : index
    %c0_0 = arith.constant 0 : index
    %0 = vector.load %arg0[%c0, %c0_0] : memref<64x32xf32, #tpu.memory_space<vmem>>, vector<64x32xf32>
    %c0_1 = arith.constant 0 : index
    %c0_2 = arith.constant 0 : index
    %1 = vector.load %arg1[%c0_1, %c0_2] : memref<32x128xbf16, #tpu.memory_space<vmem>>, vector<32x128xbf16>
    %c0_3 = arith.constant 0 : index
    %c0_4 = arith.constant 0 : index
    %2 = vector.load %arg2[%c0_3, %c0_4] : memref<128x128xbf16, #tpu.memory_space<vmem>>, vector<128x128xbf16>
    %c0_5 = arith.constant 0 : index
    %c0_6 = arith.constant 0 : index
    %3 = vector.load %arg3[%c0_5, %c0_6] : memref<1x128xf32, #tpu.memory_space<vmem>>, vector<1x128xf32>
    %cst = arith.constant dense<0.000000e+00> : vector<32xf32>
    %4 = vector.multi_reduction <add>, %0, %cst [0] : vector<64x32xf32> to vector<32xf32>
    %5 = vector.shape_cast %4 : vector<32xf32> to vector<1x32xf32>
    %cst_7 = arith.constant 6.400000e+01 : f32
    %6 = vector.broadcast %cst_7 : f32 to vector<1x32xf32>
    %7 = arith.divf %5, %6 : vector<1x32xf32>
    %8 = vector.broadcast %7 : vector<1x32xf32> to vector<64x32xf32>
    %9 = arith.subf %0, %8 : vector<64x32xf32>
    %10 = arith.truncf %9 : vector<64x32xf32> to vector<64x32xbf16>
    %cst_8 = arith.constant dense<0.000000e+00> : vector<64x128xf32>
    %11 = tpu.matmul %10, %1, %cst_8 {dimension_numbers = #tpu.dot_dimension_numbers<[1], [0], [0], [1], [0, 0, 1, 1], [], []>} : vector<64x32xbf16>, vector<32x128xbf16>, vector<64x128xf32> -> vector<64x128xf32>
    %cst_9 = arith.constant 0.000000e+00 : f32
    %12 = vector.broadcast %cst_9 : f32 to vector<64x128xf32>
    %13 = arith.maximumf %11, %12 : vector<64x128xf32>
    %14 = arith.mulf %11, %11 : vector<64x128xf32>
    %15 = vector.shape_cast %14 : vector<64x128xf32> to vector<1x64x128xf32>
    %cst_10 = arith.constant dense<0.000000e+00> : vector<1xf32>
    %16 = vector.multi_reduction <add>, %15, %cst_10 [1, 2] : vector<1x64x128xf32> to vector<1xf32>
    %17 = vector.shape_cast %16 : vector<1xf32> to vector<1x1x1xf32>
    %18 = vector.extract %17[0, 0, 0] : f32 from vector<1x1x1xf32>
    %cst_11 = arith.constant 1.562500e-02 : f32
    %19 = arith.mulf %18, %cst_11 : f32
    %cst_12 = arith.constant 9.99999974E-6 : f32
    %20 = arith.addf %cst_12, %19 : f32
    %21 = math.rsqrt %20 : f32
    %cst_13 = arith.constant 1.000000e+00 : f32
    %22 = arith.mulf %cst_13, %21 : f32
    %23 = arith.truncf %13 : vector<64x128xf32> to vector<64x128xbf16>
    %cst_14 = arith.constant dense<0.000000e+00> : vector<64x128xf32>
    %24 = tpu.matmul %23, %2, %cst_14 {dimension_numbers = #tpu.dot_dimension_numbers<[1], [0], [0], [1], [0, 0, 1, 1], [], []>} : vector<64x128xbf16>, vector<128x128xbf16>, vector<64x128xf32> -> vector<64x128xf32>
    %25 = vector.broadcast %22 : f32 to vector<64x128xf32>
    %26 = arith.mulf %25, %24 : vector<64x128xf32>
    %27 = vector.broadcast %3 : vector<1x128xf32> to vector<64x128xf32>
    %28 = arith.addf %26, %27 : vector<64x128xf32>
    %c0_15 = arith.constant 0 : index
    %c0_16 = arith.constant 0 : index
    %29 = vector.load %arg4[%c0_15, %c0_16] : memref<64x128xf32, #tpu.memory_space<vmem>>, vector<64x128xf32>
    tpu.vector_store %arg4[%c0_15, %c0_16], %28 {strides = array<i32>} : memref<64x128xf32, #tpu.memory_space<vmem>>, vector<64x128xf32>,
    return
  }
}

</mosaic_0001>

<llo_original>
// kernel: _decoder_forward_impl.1
$region0: #{_decoder_forward_impl.1}
  #allocation0 [shape = 'u32[]', space=smem, size = 0x4, offset = 0x4, fixed_abs, tag = 'smem constant byte address 0x4 - core index']
  #allocation1 [shape = 'u32[144,128]{1,0:T(1,128)}', space=vmem, size = 0x12000, scoped, tag = 'internal scratch']
  %s0 = inlined_call_operand.vmem [shape: f32[64,32], index: 0, kind: input, shape index: {}]
  %s1 = inlined_call_operand.vmem [shape: bf16[32,128], index: 1, kind: input, shape index: {}]
  %s2 = inlined_call_operand.vmem [shape: bf16[128,128], index: 2, kind: input, shape index: {}]
  %s3 = inlined_call_operand.vmem [shape: f32[1,128], index: 3, kind: input, shape index: {}]
  %s4 = inlined_call_operand.vmem [shape: f32[64,128], index: 4, kind: output, shape index: {}]
  %s5 = sld [smem:[#allocation0]]
  $region26: #{_decoder_forward_impl.1} parent=0
    _
  %s7 = ssub.s32 1, %s5
  %s8 = scalar_select 0, %s7, %s5
  // Predicated region
  $region2: #{_decoder_forward_impl.1} parent=0 // pred_check
    _
  $region3: #{_decoder_forward_impl.1} parent=0 // pred_check_branch
    %10 = sbr.rel (0) target = $region5
  $region4: #{_decoder_forward_impl.1} parent=0 // pred_region
    _
  $region5: #{_decoder_forward_impl.1} parent=0 // pred_fallthru
    _
  // Predicated region
  $region6: #{_decoder_forward_impl.1} parent=0 // pred_check
    _
  $region7: #{_decoder_forward_impl.1} parent=0 // pred_check_branch
    %12 = sbr.rel (0) target = $region9
  $region8: #{_decoder_forward_impl.1} parent=0 // pred_region
    _
  $region9: #{_decoder_forward_impl.1} parent=0 // pred_fallthru
    _
  // Predicated region
  $region10: #{_decoder_forward_impl.1} parent=0 // pred_check
    _
  $region11: #{_decoder_forward_impl.1} parent=0 // pred_check_branch
    %14 = sbr.rel (0) target = $region13
  $region12: #{_decoder_forward_impl.1} parent=0 // pred_region
    _
  $region13: #{_decoder_forward_impl.1} parent=0 // pred_fallthru
    _
  // Predicated region
  $region14: #{_decoder_forward_impl.1} parent=0 // pred_check
    _
  $region15: #{_decoder_forward_impl.1} parent=0 // pred_check_branch
    %16 = sbr.rel (0) target = $region17
  $region16: #{_decoder_forward_impl.1} parent=0 // pred_region
    _
  $region17: #{_decoder_forward_impl.1} parent=0 // pred_fallthru
    _
  %v18 = vld [vmem:[%s0] sm:$0xff]
  %v19 = vld [vmem:[%s0 + $0x8] sm:$0xff]
  %v20 = vld [vmem:[%s0 + $0x10] sm:$0xff]
  %v21 = vld [vmem:[%s0 + $0x18] sm:$0xff]
  %v22 = vld [vmem:[%s0 + $0x20] sm:$0xff]
  %v23 = vld [vmem:[%s0 + $0x28] sm:$0xff]
  %v24 = vld [vmem:[%s0 + $0x30] sm:$0xff]
  %v25 = vld [vmem:[%s0 + $0x38] sm:$0xff]
  %v26 = vld [vmem:[%s1] sm:$0xf]
  %v27 = vld [vmem:[%s1 + $0x4] sm:$0xf]
  %v28 = vld [vmem:[%s1 + $0x8] sm:$0xf]
  %v29 = vld [vmem:[%s1 + $0xc] sm:$0xf]
  %v30 = vld [vmem:[%s2] sm:$0xf]
  %v31 = vld [vmem:[%s2 + $0x4] sm:$0xf]
  %v32 = vld [vmem:[%s2 + $0x8] sm:$0xf]
  %v33 = vld [vmem:[%s2 + $0xc] sm:$0xf]
  %v34 = vld [vmem:[%s2 + $0x10] sm:$0xf]
  %v35 = vld [vmem:[%s2 + $0x14] sm:$0xf]
  %v36 = vld [vmem:[%s2 + $0x18] sm:$0xf]
  %v37 = vld [vmem:[%s2 + $0x1c] sm:$0xf]
  %v38 = vld [vmem:[%s2 + $0x20] sm:$0xf]
  %v39 = vld [vmem:[%s2 + $0x24] sm:$0xf]
  %v40 = vld [vmem:[%s2 + $0x28] sm:$0xf]
  %v41 = vld [vmem:[%s2 + $0x2c] sm:$0xf]
  %v42 = vld [vmem:[%s2 + $0x30] sm:$0xf]
  %v43 = vld [vmem:[%s2 + $0x34] sm:$0xf]
  %v44 = vld [vmem:[%s2 + $0x38] sm:$0xf]
  %v45 = vld [vmem:[%s2 + $0x3c] sm:$0xf]
  %v46 = vld [vmem:[%s3] sm:$0x1]
  %vm47 = vcmask 261120
  %v48 = vsel %vm47, %v18, 0.0
  %v49 = vsel %vm47, %v19, 0.0
  %v50 = vadd.f32 %v48, %v49
  %v51 = vsel %vm47, %v20, 0.0
  %v52 = vadd.f32 %v50, %v51
  %v53 = vsel %vm47, %v21, 0.0
  %v54 = vadd.f32 %v52, %v53
  %v55 = vsel %vm47, %v22, 0.0
  %v56 = vadd.f32 %v54, %v55
  %v57 = vsel %vm47, %v23, 0.0
  %v58 = vadd.f32 %v56, %v57
  %v59 = vsel %vm47, %v24, 0.0
  %v60 = vadd.f32 %v58, %v59
  %v61 = vsel %vm47, %v25, 0.0
  %v62 = vadd.f32 %v60, %v61
  %v63 = vrot.slane %v62, 4
  %v64 = vadd.f32 %v62, %v63
  %v65 = vrot.slane %v64, 2
  %v66 = vadd.f32 %v64, %v65
  %v67 = vrot.slane %v66, 1
  %v68 = vadd.f32 %v66, %v67
  %v69 = vrcp.pop 64.0
  %v70 = vmul.f32 %v68, %v69
  %v71 = vsub.f32 %v18, %v70
  %v72 = vsub.f32 %v19, %v70
  %v73 = vsub.f32 %v20, %v70
  %v74 = vsub.f32 %v21, %v70
  %v75 = vsub.f32 %v22, %v70
  %v76 = vsub.f32 %v23, %v70
  %v77 = vsub.f32 %v24, %v70
  %v78 = vsub.f32 %v25, %v70
  %v79 = vpack.c.bf16 %v72, %v71
  %v80 = vpack.c.bf16 %v74, %v73
  %v81 = vpack.c.bf16 %v76, %v75
  %v82 = vpack.c.bf16 %v78, %v77
  %v87 = vunpack.c.l.b16 %v26
  %v88 = vunpack.c.l.b16 %v27
  %v89 = vunpack.c.l.b16 %v28
  %v90 = vunpack.c.l.b16 %v29
  %v91 = vpack.c.b16 %v88, %v87
  %v92 = vpack.c.b16 %v90, %v89
  %v96 = vsel %vm47, %v79, 0
  %v99 = vsel %vm47, %v80, 0
  %v102 = vsel %vm47, %v81, 0
  %v105 = vsel %vm47, %v82, 0
  %107 = vmatprep.subr.bf16.mxu0 0
  %108 = vmatpush1.bf16.msra.mxu0 0
  %109 = vmatprep.subr.bf16.mxu0 0
  %110 = vmatpush1.bf16.msra.mxu0 0
  %111 = vmatprep.subr.bf16.mxu0 0
  %112 = vmatpush1.bf16.msra.mxu0 0
  %113 = vmatprep.subr.bf16.mxu0 0
  %114 = vmatpush1.bf16.msra.mxu0 0
  %115 = vmatprep.subr.bf16.mxu0 0
  %116 = vmatpush1.bf16.msra.mxu0 0
  %117 = vmatprep.subr.bf16.mxu0 0
  %118 = vmatpush1.bf16.msra.mxu0 0
  %119 = vmatprep.subr.bf16.mxu0 0
  %120 = vmatpush1.bf16.msra.mxu0 %v92
  %121 = vmatprep.subr.bf16.mxu0 0
  %122 = vmatpush1.bf16.msra.mxu0 %v91
  %123 = vmatprep.subr.bf16.mxu0 0
  %124 = vmatpush2.bf16.msra.mxu0 0
  %125 = vmatprep.subr.bf16.mxu0 0
  %126 = vmatpush2.bf16.msra.mxu0 0
  %127 = vmatprep.subr.bf16.mxu0 0
  %128 = vmatpush2.bf16.msra.mxu0 0
  %129 = vmatprep.subr.bf16.mxu0 0
  %130 = vmatpush2.bf16.msra.mxu0 0
  %131 = vmatprep.subr.bf16.mxu0 0
  %132 = vmatpush2.bf16.msra.mxu0 0
  %133 = vmatprep.subr.bf16.mxu0 0
  %134 = vmatpush2.bf16.msra.mxu0 0
  %135 = vmatprep.subr.bf16.mxu0 0
  %136 = vmatpush2.bf16.msra.mxu0 0
  %137 = vmatprep.subr.bf16.mxu0 0
  %138 = vmatpush2.bf16.msra.mxu0 0
  %139 = vmatprep.mubr.bf16.mxu0 0
  %140 = vmatmul.mubr.bf16.gmra.mxu0 %v96
  %v141 = vpop.f32.mrf.mxu0
  %v142 = vadd.f32 0.0, %v141
  %v143 = vpop.f32.mrf.mxu0
  %v144 = vpop.f32.mrf.mxu0
  %v145 = vadd.f32 0.0, %v144
  %v146 = vpop.f32.mrf.mxu0
  %147 = vmatprep.mubr.bf16.mxu0 0
  %148 = vmatmul.mubr.bf16.gmra.mxu0 %v99
  %v149 = vpop.f32.mrf.mxu0
  %v150 = vadd.f32 0.0, %v149
  %v151 = vpop.f32.mrf.mxu0
  %v152 = vpop.f32.mrf.mxu0
  %v153 = vadd.f32 0.0, %v152
  %v154 = vpop.f32.mrf.mxu0
  %155 = vmatprep.mubr.bf16.mxu0 0
  %156 = vmatmul.mubr.bf16.gmra.mxu0 %v102
  %v157 = vpop.f32.mrf.mxu0
  %v158 = vadd.f32 0.0, %v157
  %v159 = vpop.f32.mrf.mxu0
  %v160 = vpop.f32.mrf.mxu0
  %v161 = vadd.f32 0.0, %v160
  %v162 = vpop.f32.mrf.mxu0
  %163 = vmatprep.mubr.bf16.mxu0 0
  %164 = vmatmul.mubr.bf16.gmra.mxu0 %v105
  %v165 = vpop.f32.mrf.mxu0
  %v166 = vadd.f32 0.0, %v165
  %v167 = vpop.f32.mrf.mxu0
  %v168 = vpop.f32.mrf.mxu0
  %v169 = vadd.f32 0.0, %v168
  %v170 = vpop.f32.mrf.mxu0
  %171 = vdwg.mxu0
  %v172 = vmax.f32 %v142, 0.0
  %v173 = vmax.f32 %v145, 0.0
  %v174 = vmax.f32 %v150, 0.0
  %v175 = vmax.f32 %v153, 0.0
  %v176 = vmax.f32 %v158, 0.0
  %v177 = vmax.f32 %v161, 0.0
  %v178 = vmax.f32 %v166, 0.0
  %v179 = vmax.f32 %v169, 0.0
  %v180 = vmul.f32 %v142, %v142
  %v181 = vmul.f32 %v145, %v145
  %v182 = vmul.f32 %v150, %v150
  %v183 = vmul.f32 %v153, %v153
  %v184 = vmul.f32 %v158, %v158
  %v185 = vmul.f32 %v161, %v161
  %v186 = vmul.f32 %v166, %v166
  %v187 = vmul.f32 %v169, %v169
  %v188 = vadd.f32 %v180, %v181
  %v189 = vadd.f32 %v188, %v182
  %v190 = vadd.f32 %v189, %v183
  %v191 = vadd.f32 %v190, %v184
  %v192 = vadd.f32 %v191, %v185
  %v193 = vadd.f32 %v192, %v186
  %v194 = vadd.f32 %v193, %v187
  %195 = vadd.xlane.f32.xlu0 %v194
  %v196 = vpop.xlane.xlu0 %195
  %v197 = vrot.slane %v196, 4
  %v198 = vadd.f32 %v196, %v197
  %v199 = vrot.slane %v198, 2
  %v200 = vadd.f32 %v198, %v199
  %v201 = vrot.slane %v200, 1
  %v202 = vadd.f32 %v200, %v201
  %s203 = vtos %v202
  %s204 = smul.f32 %s203, 0.015625
  %s205 = sadd.f32 %s204, 1e-05
  %v206 = vstv %s205
  %v207 = vrsqrt.pop %v206
  %s208 = vtos %v207
  %v209 = vpack.c.bf16 %v173, %v172
  %v210 = vpack.c.bf16 %v175, %v174
  %v211 = vpack.c.bf16 %v177, %v176
  %v212 = vpack.c.bf16 %v179, %v178
  %v229 = vunpack.c.l.b16 %v30
  %v230 = vunpack.c.l.b16 %v31
  %v231 = vunpack.c.l.b16 %v32
  %v232 = vunpack.c.l.b16 %v33
  %v233 = vunpack.c.l.b16 %v34
  %v234 = vunpack.c.l.b16 %v35
  %v235 = vunpack.c.l.b16 %v36
  %v236 = vunpack.c.l.b16 %v37
  %v237 = vunpack.c.l.b16 %v38
  %v238 = vunpack.c.l.b16 %v39
  %v239 = vunpack.c.l.b16 %v40
  %v240 = vunpack.c.l.b16 %v41
  %v241 = vunpack.c.l.b16 %v42
  %v242 = vunpack.c.l.b16 %v43
  %v243 = vunpack.c.l.b16 %v44
  %v244 = vunpack.c.l.b16 %v45
  %v245 = vpack.c.b16 %v230, %v229
  %v246 = vpack.c.b16 %v232, %v231
  %v247 = vpack.c.b16 %v234, %v233
  %v248 = vpack.c.b16 %v236, %v235
  %v249 = vpack.c.b16 %v238, %v237
  %v250 = vpack.c.b16 %v240, %v239
  %v251 = vpack.c.b16 %v242, %v241
  %v252 = vpack.c.b16 %v244, %v243
  %261 = vmatprep.subr.bf16.mxu0 0
  %262 = vmatpush1.bf16.msra.mxu0 %v252
  %263 = vmatprep.subr.bf16.mxu0 0
  %264 = vmatpush1.bf16.msra.mxu0 %v251
  %265 = vmatprep.subr.bf16.mxu0 0
  %266 = vmatpush1.bf16.msra.mxu0 %v250
  %267 = vmatprep.subr.bf16.mxu0 0
  %268 = vmatpush1.bf16.msra.mxu0 %v249
  %269 = vmatprep.subr.bf16.mxu0 0
  %270 = vmatpush1.bf16.msra.mxu0 %v248
  %271 = vmatprep.subr.bf16.mxu0 0
  %272 = vmatpush1.bf16.msra.mxu0 %v247
  %273 = vmatprep.subr.bf16.mxu0 0
  %274 = vmatpush1.bf16.msra.mxu0 %v246
  %275 = vmatprep.subr.bf16.mxu0 0
  %276 = vmatpush1.bf16.msra.mxu0 %v245
  %277 = vmatprep.subr.bf16.mxu0 0
  %278 = vmatpush2.bf16.msra.mxu0 0
  %279 = vmatprep.subr.bf16.mxu0 0
  %280 = vmatpush2.bf16.msra.mxu0 0
  %281 = vmatprep.subr.bf16.mxu0 0
  %282 = vmatpush2.bf16.msra.mxu0 0
  %283 = vmatprep.subr.bf16.mxu0 0
  %284 = vmatpush2.bf16.msra.mxu0 0
  %285 = vmatprep.subr.bf16.mxu0 0
  %286 = vmatpush2.bf16.msra.mxu0 0
  %287 = vmatprep.subr.bf16.mxu0 0
  %288 = vmatpush2.bf16.msra.mxu0 0
  %289 = vmatprep.subr.bf16.mxu0 0
  %290 = vmatpush2.bf16.msra.mxu0 0
  %291 = vmatprep.subr.bf16.mxu0 0
  %292 = vmatpush2.bf16.msra.mxu0 0
  %293 = vmatprep.mubr.bf16.mxu0 0
  %294 = vmatmul.mubr.bf16.gmra.mxu0 %v209
  %v295 = vpop.f32.mrf.mxu0
  %v296 = vadd.f32 0.0, %v295
  %v297 = vpop.f32.mrf.mxu0
  %v298 = vpop.f32.mrf.mxu0
  %v299 = vadd.f32 0.0, %v298
  %v300 = vpop.f32.mrf.mxu0
  %301 = vmatprep.mubr.bf16.mxu0 0
  %302 = vmatmul.mubr.bf16.gmra.mxu0 %v210
  %v303 = vpop.f32.mrf.mxu0
  %v304 = vadd.f32 0.0, %v303
  %v305 = vpop.f32.mrf.mxu0
  %v306 = vpop.f32.mrf.mxu0
  %v307 = vadd.f32 0.0, %v306
  %v308 = vpop.f32.mrf.mxu0
  %309 = vmatprep.mubr.bf16.mxu0 0
  %310 = vmatmul.mubr.bf16.gmra.mxu0 %v211
  %v311 = vpop.f32.mrf.mxu0
  %v312 = vadd.f32 0.0, %v311
  %v313 = vpop.f32.mrf.mxu0
  %v314 = vpop.f32.mrf.mxu0
  %v315 = vadd.f32 0.0, %v314
  %v316 = vpop.f32.mrf.mxu0
  %317 = vmatprep.mubr.bf16.mxu0 0
  %318 = vmatmul.mubr.bf16.gmra.mxu0 %v212
  %v319 = vpop.f32.mrf.mxu0
  %v320 = vadd.f32 0.0, %v319
  %v321 = vpop.f32.mrf.mxu0
  %v322 = vpop.f32.mrf.mxu0
  %v323 = vadd.f32 0.0, %v322
  %v324 = vpop.f32.mrf.mxu0
  %325 = vdwg.mxu0
  %v326 = vstv %s208
  %v327 = vmul.f32 %v326, %v296
  %v328 = vmul.f32 %v326, %v299
  %v329 = vmul.f32 %v326, %v304
  %v330 = vmul.f32 %v326, %v307
  %v331 = vmul.f32 %v326, %v312
  %v332 = vmul.f32 %v326, %v315
  %v333 = vmul.f32 %v326, %v320
  %v334 = vmul.f32 %v326, %v323
  %v336 = vlaneseq
  %v337 = vshrl.u32 %v336, 7
  %v338 = vsub.s32 0, %v337
  %v339 = vrot.slane %v46, %v338
  %v341 = vadd.f32 %v327, %v339
  %v342 = vadd.f32 %v328, %v339
  %v343 = vadd.f32 %v329, %v339
  %v344 = vadd.f32 %v330, %v339
  %v345 = vadd.f32 %v331, %v339
  %v346 = vadd.f32 %v332, %v339
  %v347 = vadd.f32 %v333, %v339
  %v348 = vadd.f32 %v334, %v339
  %349 = vst [vmem:[%s4] sm:$0xff] %v341
  %350 = vst [vmem:[%s4 + $0x8] sm:$0xff] %v342
  %351 = vst [vmem:[%s4 + $0x10] sm:$0xff] %v343
  %352 = vst [vmem:[%s4 + $0x18] sm:$0xff] %v344
  %353 = vst [vmem:[%s4 + $0x20] sm:$0xff] %v345
  %354 = vst [vmem:[%s4 + $0x28] sm:$0xff] %v346
  %355 = vst [vmem:[%s4 + $0x30] sm:$0xff] %v347
  %356 = vst [vmem:[%s4 + $0x38] sm:$0xff] %v348
  // Predicated region
  $region18: #{_decoder_forward_impl.1} parent=0 // pred_check
    _
  $region19: #{_decoder_forward_impl.1} parent=0 // pred_check_branch
    %358 = sbr.rel (0) target = $region21
  $region20: #{_decoder_forward_impl.1} parent=0 // pred_region
    _
  $region21: #{_decoder_forward_impl.1} parent=0 // pred_fallthru
    _
  // Predicated region
  $region22: #{_decoder_forward_impl.1} parent=0 // pred_check
    _
  $region23: #{_decoder_forward_impl.1} parent=0 // pred_check_branch
    %360 = sbr.rel (0) target = $region25
  $region24: #{_decoder_forward_impl.1} parent=0 // pred_region
    _
  $region25: #{_decoder_forward_impl.1} parent=0 // pred_fallthru
    _

</llo_original>
